<compile_context>
chip_gen: v7x
topology: tpu7x:2x2x1
jax: 0.10.0
libtpu: 0.0.40
codegen_flags: <defaults>
</compile_context>

<pallas_src>
import jax
import jax.numpy as jnp
from jax.experimental import pallas as pl
from jax.experimental.pallas import tpu as pltpu

# ----------------------------- configuration -------------------------------
B = 2            # batch
T = 8            # sequence length
N_EMBED = 32     # n_embed
HIDDEN = 4 * N_EMBED   # 128


# ------------------------------- kernel ------------------------------------
def ff_kernel(x_ref, w1_ref, b1_ref, w2t_ref, b2_ref, out_ref):
    # Whole problem in one grid step: x is the full (B*T, C) activation slab.
    x = x_ref[...]                                                  # (16, 32)

    # Linear 1: (16, 32) @ (32, 128) + (1, 128)  -> (16, 128)
    h = jnp.dot(x, w1_ref[...],
                preferred_element_type=jnp.float32) + b1_ref[...]
    # ReLU
    h = jnp.maximum(h, 0.0)

    # Linear 2 with lane-dense weight w2t of shape (C, 4C) = (32, 128):
    # contract the 4C axis of both operands (== h @ w2t.T) so the MXU gets a
    # transposed-RHS matmul and no explicit transpose is materialized.
    y = jax.lax.dot_general(
        h, w2t_ref[...],
        dimension_numbers=(((1,), (1,)), ((), ())),
        preferred_element_type=jnp.float32) + b2_ref[...]           # (16, 32)

    # TODO(synk): nn.Dropout skipped (identity in eval mode / dropout = 0.0).
    out_ref[...] = y


# ------------------------------- wrapper ------------------------------------
@jax.jit
def feed_forward(x, params):
    w1, b1, w2t, b2 = params
    BT = B * T
    x2d = x.reshape(BT, N_EMBED)          # flatten (B, T, C) -> (B*T, C)

    out = pl.pallas_call(
        ff_kernel,
        out_shape=jax.ShapeDtypeStruct((BT, N_EMBED), jnp.float32),
        grid_spec=pltpu.PrefetchScalarGridSpec(
            num_scalar_prefetch=0,
            grid=(1,),                                    # single step
            in_specs=[
                pl.BlockSpec((BT, N_EMBED), lambda i: (0, 0)),       # x
                pl.BlockSpec((N_EMBED, HIDDEN), lambda i: (0, 0)),   # w1
                pl.BlockSpec((1, HIDDEN), lambda i: (0, 0)),         # b1
                pl.BlockSpec((N_EMBED, HIDDEN), lambda i: (0, 0)),   # w2 (pre-T)
                pl.BlockSpec((1, N_EMBED), lambda i: (0, 0)),        # b2
            ],
            out_specs=pl.BlockSpec((BT, N_EMBED), lambda i: (0, 0)),
        ),
        compiler_params=pltpu.CompilerParams(
            dimension_semantics=("arbitrary",)),
    )(x2d, w1, b1, w2t, b2)

    return out.reshape(B, T, N_EMBED)


# ------------------------- pure-JAX reference -------------------------------
def reference_ff(x, params):
    w1, b1, w2t, b2 = params
    h = jnp.maximum(x @ w1 + b1[0], 0.0)
    return h @ w2t.T + b2[0]


# --------------------------------- main --------------------------------------
if __name__ == "__main__":
    key = jax.random.PRNGKey(0)
    keys = jax.random.split(key, 8)

    def init(k, shape, scale=0.1):
        return jax.random.normal(k, shape, dtype=jnp.float32) * scale

    x = jax.random.normal(keys[0], (B, T, N_EMBED), dtype=jnp.float32)

    params = (
        init(keys[1], (N_EMBED, HIDDEN)),   # w1  : Linear(n_embed, 4*n_embed)
        init(keys[2], (1, HIDDEN)),         # b1
        init(keys[3], (N_EMBED, HIDDEN)),   # w2t : Linear(4*n_embed, n_embed) weight, stored transposed (lane-dense)
        init(keys[4], (1, N_EMBED)),        # b2
    )

    out = feed_forward(x, params)
    out = jax.block_until_ready(out)

    ref = reference_ff(x, params)
    assert out.shape == (B, T, N_EMBED)
    assert jnp.allclose(out, ref, atol=1e-4, rtol=1e-4), "mismatch vs reference"

    print("KERNEL_OK")
</pallas_src>

<mosaic_0001>
module attributes {stable_mosaic.version = 11 : i64} {
  func.func @ff_kernel(%arg0: i32, %arg1: memref<16x32xf32, #tpu.memory_space<vmem>>, %arg2: memref<32x128xf32, #tpu.memory_space<vmem>>, %arg3: memref<1x128xf32, #tpu.memory_space<vmem>>, %arg4: memref<32x128xf32, #tpu.memory_space<vmem>>, %arg5: memref<1x32xf32, #tpu.memory_space<vmem>>, %arg6: memref<16x32xf32, #tpu.memory_space<vmem>>) attributes {dimension_semantics = [#tpu.dimension_semantics<arbitrary>], iteration_bounds = array<i64: 1>, scalar_prefetch = 0 : i64, scratch_operands = 0 : i64, tpu.core_type = #tpu.core_type<tc>, window_params = [{pipeline_mode = #tpu.pipeline_mode<synchronous>, transform_indices = @transform_0, window_bounds = array<i64: 16, 32>}, {pipeline_mode = #tpu.pipeline_mode<synchronous>, transform_indices = @transform_1, window_bounds = array<i64: 32, 128>}, {pipeline_mode = #tpu.pipeline_mode<synchronous>, transform_indices = @transform_2, window_bounds = array<i64: 1, 128>}, {pipeline_mode = #tpu.pipeline_mode<synchronous>, transform_indices = @transform_3, window_bounds = array<i64: 32, 128>}, {pipeline_mode = #tpu.pipeline_mode<synchronous>, transform_indices = @transform_4, window_bounds = array<i64: 1, 32>}, {pipeline_mode = #tpu.pipeline_mode<synchronous>, transform_indices = @transform_5, window_bounds = array<i64: 16, 32>}]} {
    %c0 = arith.constant 0 : index
    %c0_0 = arith.constant 0 : index
    %0 = vector.load %arg1[%c0, %c0_0] : memref<16x32xf32, #tpu.memory_space<vmem>>, vector<16x32xf32>
    %c0_1 = arith.constant 0 : index
    %c0_2 = arith.constant 0 : index
    %1 = vector.load %arg2[%c0_1, %c0_2] : memref<32x128xf32, #tpu.memory_space<vmem>>, vector<32x128xf32>
    %cst = arith.constant dense<0.000000e+00> : vector<16x128xf32>
    %2 = tpu.matmul %0, %1, %cst {dimension_numbers = #tpu.dot_dimension_numbers<[1], [0], [0], [1], [0, 0, 1, 1], [], []>} : vector<16x32xf32>, vector<32x128xf32>, vector<16x128xf32> -> vector<16x128xf32>
    %c0_3 = arith.constant 0 : index
    %c0_4 = arith.constant 0 : index
    %3 = vector.load %arg3[%c0_3, %c0_4] : memref<1x128xf32, #tpu.memory_space<vmem>>, vector<1x128xf32>
    %4 = vector.broadcast %3 : vector<1x128xf32> to vector<16x128xf32>
    %5 = arith.addf %2, %4 : vector<16x128xf32>
    %cst_5 = arith.constant 0.000000e+00 : f32
    %6 = vector.broadcast %cst_5 : f32 to vector<16x128xf32>
    %7 = arith.maximumf %5, %6 : vector<16x128xf32>
    %c0_6 = arith.constant 0 : index
    %c0_7 = arith.constant 0 : index
    %8 = vector.load %arg4[%c0_6, %c0_7] : memref<32x128xf32, #tpu.memory_space<vmem>>, vector<32x128xf32>
    %cst_8 = arith.constant dense<0.000000e+00> : vector<16x32xf32>
    %9 = tpu.matmul %7, %8, %cst_8 {dimension_numbers = #tpu.dot_dimension_numbers<[1], [1], [0], [0], [0, 0, 1, 0], [], []>} : vector<16x128xf32>, vector<32x128xf32>, vector<16x32xf32> -> vector<16x32xf32>
    %c0_9 = arith.constant 0 : index
    %c0_10 = arith.constant 0 : index
    %10 = vector.load %arg5[%c0_9, %c0_10] : memref<1x32xf32, #tpu.memory_space<vmem>>, vector<1x32xf32>
    %11 = vector.broadcast %10 : vector<1x32xf32> to vector<16x32xf32>
    %12 = arith.addf %9, %11 : vector<16x32xf32>
    %c0_11 = arith.constant 0 : index
    %c0_12 = arith.constant 0 : index
    %13 = vector.load %arg6[%c0_11, %c0_12] : memref<16x32xf32, #tpu.memory_space<vmem>>, vector<16x32xf32>
    tpu.vector_store %arg6[%c0_11, %c0_12], %12 {strides = array<i32>} : memref<16x32xf32, #tpu.memory_space<vmem>>, vector<16x32xf32>,
    return
  }
  func.func @transform_0(%arg0: i32) -> (i32, i32) {
    %c0_i32 = arith.constant 0 : i32
    %c0_i32_0 = arith.constant 0 : i32
    %c0_i32_1 = arith.constant 0 : i32
    return %c0_i32, %c0_i32_0 : i32, i32
  }
  func.func @transform_1(%arg0: i32) -> (i32, i32) {
    %c0_i32 = arith.constant 0 : i32
    %c0_i32_0 = arith.constant 0 : i32
    %c0_i32_1 = arith.constant 0 : i32
    return %c0_i32, %c0_i32_0 : i32, i32
  }
  func.func @transform_2(%arg0: i32) -> (i32, i32) {
    %c0_i32 = arith.constant 0 : i32
    %c0_i32_0 = arith.constant 0 : i32
    %c0_i32_1 = arith.constant 0 : i32
    return %c0_i32, %c0_i32_0 : i32, i32
  }
  func.func @transform_3(%arg0: i32) -> (i32, i32) {
    %c0_i32 = arith.constant 0 : i32
    %c0_i32_0 = arith.constant 0 : i32
    %c0_i32_1 = arith.constant 0 : i32
    return %c0_i32, %c0_i32_0 : i32, i32
  }
  func.func @transform_4(%arg0: i32) -> (i32, i32) {
    %c0_i32 = arith.constant 0 : i32
    %c0_i32_0 = arith.constant 0 : i32
    %c0_i32_1 = arith.constant 0 : i32
    return %c0_i32, %c0_i32_0 : i32, i32
  }
  func.func @transform_5(%arg0: i32) -> (i32, i32) {
    %c0_i32 = arith.constant 0 : i32
    %c0_i32_0 = arith.constant 0 : i32
    %c0_i32_1 = arith.constant 0 : i32
    return %c0_i32, %c0_i32_0 : i32, i32
  }
}

</mosaic_0001>

<llo_original>
// kernel: feed_forward.1
$region0: #{feed_forward.1}
  #allocation0 [shape = 'u32[]', space=smem, size = 0x4, offset = 0x4, fixed_abs, tag = 'smem constant byte address 0x4 - core index']
  #allocation1 [shape = 'u32[144,128]{1,0:T(1,128)}', space=vmem, size = 0x12000, scoped, tag = 'internal scratch']
  %s0 = inlined_call_operand.hbm [shape: f32[16,32], index: 0, kind: input, shape index: {}]
  %s1 = inlined_call_operand.hbm [shape: f32[32,128], index: 1, kind: input, shape index: {}]
  %s2 = inlined_call_operand.vmem [shape: f32[1,128], index: 2, kind: input, shape index: {}]
  %s3 = inlined_call_operand.hbm [shape: f32[32,128], index: 3, kind: input, shape index: {}]
  %s4 = inlined_call_operand.vmem [shape: f32[1,32], index: 4, kind: input, shape index: {}]
  %s5 = inlined_call_operand.hbm [shape: f32[16,32], index: 5, kind: output, shape index: {}]
  %s6 = sld [smem:[#allocation0]]
  $region42: #{feed_forward.1} parent=0
    _
  %s8 = ssub.s32 1, %s6
  %s9 = scalar_select 0, %s8, %s6
  $region1: #{feed_forward.1} parent=0
    #allocation2 [shape = 'u8[8192]{0}', space=vmem, size = 0x2000, scoped, tag = 'input window, operand 0, single buffered']
    #allocation3 [shape = 's32[1]{0}', space=sflag, size = 0x4, scoped, tag = 'scoped memory for feed_forward.1']
    #allocation4 [shape = 's32[1]{0}', space=sflag, size = 0x4, scoped, tag = 'scoped memory for feed_forward.1']
    #allocation5 [shape = 'u8[16384]{0}', space=vmem, size = 0x4000, scoped, tag = 'input window, operand 1, single buffered']
    #allocation6 [shape = 's32[1]{0}', space=sflag, size = 0x4, scoped, tag = 'scoped memory for feed_forward.1']
    #allocation7 [shape = 'u8[16384]{0}', space=vmem, size = 0x4000, scoped, tag = 'input window, operand 3, single buffered']
    #allocation8 [shape = 'u8[8192]{0}', space=vmem, size = 0x2000, scoped, tag = 'output window, operand 0, single buffered']
    %10 = vsyncpa [#allocation3], 0
    %11 = vsyncpa [#allocation6], 0
    %12 = vsyncpa [#allocation4], 0
    // Predicated region
    $region2: #{feed_forward.1} parent=1 // pred_check
      _
    $region3: #{feed_forward.1} parent=1 // pred_check_branch
      %14 = sbr.rel (0) target = $region5
    $region4: #{feed_forward.1} parent=1 // pred_region
      %s16 = ssub.s32 256, 256
      %17 = vsyncadd [#allocation3], %s16
      %s18 = sshll.u32 [#allocation2], 4
      %s19 = int_to_ptr.vmem [resolvable:$true] %s18
      %24 = dma.hbm_to_vmem [thread:$0]  %s0, 256, %s19, [#allocation3], 128, 128, 8
    $region5: #{feed_forward.1} parent=1 // pred_fallthru
      _
    // Predicated region
    $region6: #{feed_forward.1} parent=1 // pred_check
      _
    $region7: #{feed_forward.1} parent=1 // pred_check_branch
      %26 = sbr.rel (0) target = $region9
    $region8: #{feed_forward.1} parent=1 // pred_region
      %s28 = ssub.s32 512, 512
      %29 = vsyncadd [#allocation6], %s28
      %s30 = sshll.u32 [#allocation5], 4
      %s31 = int_to_ptr.vmem [resolvable:$true] %s30
      %36 = dma.hbm_to_vmem [thread:$0]  %s1, 512, %s31, [#allocation6], 128, 128, 8
    $region9: #{feed_forward.1} parent=1 // pred_fallthru
      _
    // Predicated region
    $region10: #{feed_forward.1} parent=1 // pred_check
      _
    $region11: #{feed_forward.1} parent=1 // pred_check_branch
      %38 = sbr.rel (0) target = $region13
    $region12: #{feed_forward.1} parent=1 // pred_region
      _
    $region13: #{feed_forward.1} parent=1 // pred_fallthru
      _
    // Predicated region
    $region14: #{feed_forward.1} parent=1 // pred_check
      _
    $region15: #{feed_forward.1} parent=1 // pred_check_branch
      %40 = sbr.rel (0) target = $region17
    $region16: #{feed_forward.1} parent=1 // pred_region
      %s42 = ssub.s32 512, 512
      %43 = vsyncadd [#allocation6], %s42
      %s44 = sshll.u32 [#allocation7], 4
      %s45 = int_to_ptr.vmem [resolvable:$true] %s44
      %50 = dma.hbm_to_vmem [thread:$0]  %s3, 512, %s45, [#allocation6], 128, 128, 8
    $region17: #{feed_forward.1} parent=1 // pred_fallthru
      _
    // Predicated region
    $region18: #{feed_forward.1} parent=1 // pred_check
      _
    $region19: #{feed_forward.1} parent=1 // pred_check_branch
      %52 = sbr.rel (0) target = $region21
    $region20: #{feed_forward.1} parent=1 // pred_region
      _
    $region21: #{feed_forward.1} parent=1 // pred_fallthru
      _
    // Predicated region
    $region22: #{feed_forward.1} parent=1 // pred_check
      _
    $region23: #{feed_forward.1} parent=1 // pred_check_branch
      %54 = sbr.rel (0) target = $region25
    $region24: #{feed_forward.1} parent=1 // pred_region
      %55 = dma.done [#allocation3], 256
    $region25: #{feed_forward.1} parent=1 // pred_fallthru
      _
    // Predicated region
    $region26: #{feed_forward.1} parent=1 // pred_check
      _
    $region27: #{feed_forward.1} parent=1 // pred_check_branch
      %57 = sbr.rel (0) target = $region29
    $region28: #{feed_forward.1} parent=1 // pred_region
      %58 = dma.done [#allocation6], 512
    $region29: #{feed_forward.1} parent=1 // pred_fallthru
      _
    // Predicated region
    $region30: #{feed_forward.1} parent=1 // pred_check
      _
    $region31: #{feed_forward.1} parent=1 // pred_check_branch
      %60 = sbr.rel (0) target = $region33
    $region32: #{feed_forward.1} parent=1 // pred_region
      %61 = dma.done [#allocation6], 512
    $region33: #{feed_forward.1} parent=1 // pred_fallthru
      _
    %v62 = vld [vmem:[#allocation2] sm:$0xff]
    %v63 = vld [vmem:[#allocation2 + $0x8] sm:$0xff]
    %v64 = vld [vmem:[#allocation5] sm:$0xff]
    %v65 = vld [vmem:[#allocation5 + $0x8] sm:$0xff]
    %v66 = vld [vmem:[#allocation5 + $0x10] sm:$0xff]
    %v67 = vld [vmem:[#allocation5 + $0x18] sm:$0xff]
    %v68 = vld [vmem:[%s2] sm:$0x1]
    %v70 = vlaneseq
    %v71 = vshrl.u32 %v70, 7
    %v72 = vsub.s32 0, %v71
    %v73 = vrot.slane %v68, %v72
    %vm75 = vcmask 261120
    %v77 = vsel %vm75, %v62, 0
    %v80 = vsel %vm75, %v63, 0
    %82 = vmatprep.subr.mxu0 0.0
    %83 = vmatpush1.msra.mxu0 %v64
    %84 = vmatprep.subr.mxu0 0.0
    %85 = vmatpush1.msra.mxu0 %v65
    %86 = vmatprep.subr.mxu0 0.0
    %87 = vmatpush1.msra.mxu0 %v66
    %88 = vmatprep.subr.mxu0 0.0
    %89 = vmatpush1.msra.mxu0 %v67
    %90 = vmatprep.subr.mxu0 0.0
    %91 = vmatpush1.msra.mxu0 0.0
    %92 = vmatprep.subr.mxu0 0.0
    %93 = vmatpush1.msra.mxu0 0.0
    %94 = vmatprep.subr.mxu0 0.0
    %95 = vmatpush1.msra.mxu0 0.0
    %96 = vmatprep.subr.mxu0 0.0
    %97 = vmatpush1.msra.mxu0 0.0
    %98 = vmatprep.subr.mxu0 0.0
    %99 = vmatpush1.msra.mxu0 0.0
    %100 = vmatprep.subr.mxu0 0.0
    %101 = vmatpush1.msra.mxu0 0.0
    %102 = vmatprep.subr.mxu0 0.0
    %103 = vmatpush1.msra.mxu0 0.0
    %104 = vmatprep.subr.mxu0 0.0
    %105 = vmatpush1.msra.mxu0 0.0
    %106 = vmatprep.subr.mxu0 0.0
    %107 = vmatpush1.msra.mxu0 0.0
    %108 = vmatprep.subr.mxu0 0.0
    %109 = vmatpush1.msra.mxu0 0.0
    %110 = vmatprep.subr.mxu0 0.0
    %111 = vmatpush1.msra.mxu0 0.0
    %112 = vmatprep.subr.mxu0 0.0
    %113 = vmatpush1.msra.mxu0 0.0
    %114 = vmatprep.subr.mxu0 0.0
    %115 = vmatpush1.msra.mxu0 0.0
    %116 = vmatprep.subr.mxu0 0.0
    %117 = vmatpush1.msra.mxu0 0.0
    %118 = vmatprep.subr.mxu0 0.0
    %119 = vmatpush1.msra.mxu0 0.0
    %120 = vmatprep.subr.mxu0 0.0
    %121 = vmatpush1.msra.mxu0 0.0
    %122 = vmatprep.subr.mxu0 0.0
    %123 = vmatpush1.msra.mxu0 0.0
    %124 = vmatprep.subr.mxu0 0.0
    %125 = vmatpush1.msra.mxu0 0.0
    %126 = vmatprep.subr.mxu0 0.0
    %127 = vmatpush1.msra.mxu0 0.0
    %128 = vmatprep.subr.mxu0 0.0
    %129 = vmatpush1.msra.mxu0 0.0
    %130 = vmatprep.subr.mxu0 0.0
    %131 = vmatpush1.msra.mxu0 0.0
    %132 = vmatprep.subr.mxu0 0.0
    %133 = vmatpush1.msra.mxu0 0.0
    %134 = vmatprep.subr.mxu0 0.0
    %135 = vmatpush1.msra.mxu0 0.0
    %136 = vmatprep.subr.mxu0 0.0
    %137 = vmatpush1.msra.mxu0 0.0
    %138 = vmatprep.subr.mxu0 0.0
    %139 = vmatpush1.msra.mxu0 0.0
    %140 = vmatprep.subr.mxu0 0.0
    %141 = vmatpush1.msra.mxu0 0.0
    %142 = vmatprep.subr.mxu0 0.0
    %143 = vmatpush1.msra.mxu0 0.0
    %144 = vmatprep.subr.mxu0 0.0
    %145 = vmatpush1.msra.mxu0 0.0
    %146 = vmatprep.mubr.f32.mxu0 0.0
    %147 = vmatmul.mubr.f32.gmra.mrb[0].mxu0 %v77
    %v148 = vpop.f32.mrb[0].mxu0
    %v149 = vadd.f32 %v73, %v148
    %v150 = vpop.f32.mrb[0].mxu0
    %151 = vmatprep.mubr.f32.mxu0 0.0
    %152 = vmatmul.mubr.f32.gmra.mrb[0].mxu0 %v80
    %v153 = vpop.f32.mrb[0].mxu0
    %v154 = vadd.f32 %v73, %v153
    %v155 = vpop.f32.mrb[0].mxu0
    %156 = vdwg.mxu0
    %v157 = vmax.f32 %v149, 0.0
    %v158 = vmax.f32 %v154, 0.0
    %v159 = vld [vmem:[#allocation7] sm:$0xff]
    %v160 = vld [vmem:[#allocation7 + $0x8] sm:$0xff]
    %v161 = vld [vmem:[#allocation7 + $0x10] sm:$0xff]
    %v162 = vld [vmem:[#allocation7 + $0x18] sm:$0xff]
    %v163 = vld [vmem:[%s4] sm:$0x1]
    %v165 = vlaneseq
    %v166 = vshrl.u32 %v165, 7
    %v167 = vsub.s32 0, %v166
    %v168 = vrot.slane %v163, %v167
    %170 = vmatprep.subr.mxu0 0.0
    %171 = vmatpush1.xpose.msra.mxu0 %v159
    %172 = vmatprep.subr.mxu0 0.0
    %173 = vmatpush1.xpose.msra.mxu0 %v160
    %174 = vmatprep.subr.mxu0 0.0
    %175 = vmatpush1.xpose.msra.mxu0 %v161
    %176 = vmatprep.subr.mxu0 0.0
    %177 = vmatpush1.xpose.msra.mxu0 %v162
    %178 = vmatprep.subr.mxu0 0.0
    %179 = vmatpush1.xpose.msra.mxu0 0.0
    %180 = vmatprep.subr.mxu0 0.0
    %181 = vmatpush1.xpose.msra.mxu0 0.0
    %182 = vmatprep.subr.mxu0 0.0
    %183 = vmatpush1.xpose.msra.mxu0 0.0
    %184 = vmatprep.subr.mxu0 0.0
    %185 = vmatpush1.xpose.msra.mxu0 0.0
    %186 = vmatprep.subr.mxu0 0.0
    %187 = vmatpush1.xpose.msra.mxu0 0.0
    %188 = vmatprep.subr.mxu0 0.0
    %189 = vmatpush1.xpose.msra.mxu0 0.0
    %190 = vmatprep.subr.mxu0 0.0
    %191 = vmatpush1.xpose.msra.mxu0 0.0
    %192 = vmatprep.subr.mxu0 0.0
    %193 = vmatpush1.xpose.msra.mxu0 0.0
    %194 = vmatprep.subr.mxu0 0.0
    %195 = vmatpush1.xpose.msra.mxu0 0.0
    %196 = vmatprep.subr.mxu0 0.0
    %197 = vmatpush1.xpose.msra.mxu0 0.0
    %198 = vmatprep.subr.mxu0 0.0
    %199 = vmatpush1.xpose.msra.mxu0 0.0
    %200 = vmatprep.subr.mxu0 0.0
    %201 = vmatpush1.xpose.msra.mxu0 0.0
    %202 = vmatprep.subr.mxu0 0.0
    %203 = vmatpush1.xpose.msra.mxu0 0.0
    %204 = vmatprep.subr.mxu0 0.0
    %205 = vmatpush1.xpose.msra.mxu0 0.0
    %206 = vmatprep.subr.mxu0 0.0
    %207 = vmatpush1.xpose.msra.mxu0 0.0
    %208 = vmatprep.subr.mxu0 0.0
    %209 = vmatpush1.xpose.msra.mxu0 0.0
    %210 = vmatprep.subr.mxu0 0.0
    %211 = vmatpush1.xpose.msra.mxu0 0.0
    %212 = vmatprep.subr.mxu0 0.0
    %213 = vmatpush1.xpose.msra.mxu0 0.0
    %214 = vmatprep.subr.mxu0 0.0
    %215 = vmatpush1.xpose.msra.mxu0 0.0
    %216 = vmatprep.subr.mxu0 0.0
    %217 = vmatpush1.xpose.msra.mxu0 0.0
    %218 = vmatprep.subr.mxu0 0.0
    %219 = vmatpush1.xpose.msra.mxu0 0.0
    %220 = vmatprep.subr.mxu0 0.0
    %221 = vmatpush1.xpose.msra.mxu0 0.0
    %222 = vmatprep.subr.mxu0 0.0
    %223 = vmatpush1.xpose.msra.mxu0 0.0
    %224 = vmatprep.subr.mxu0 0.0
    %225 = vmatpush1.xpose.msra.mxu0 0.0
    %226 = vmatprep.subr.mxu0 0.0
    %227 = vmatpush1.xpose.msra.mxu0 0.0
    %228 = vmatprep.subr.mxu0 0.0
    %229 = vmatpush1.xpose.msra.mxu0 0.0
    %230 = vmatprep.subr.mxu0 0.0
    %231 = vmatpush1.xpose.msra.mxu0 0.0
    %232 = vmatprep.subr.mxu0 0.0
    %233 = vmatpush1.xpose.msra.mxu0 0.0
    %234 = vmatprep.mubr.f32.mxu0 0.0
    %235 = vmatmul.mubr.f32.gmra.mrb[0].mxu0 %v157
    %v236 = vpop.f32.mrb[0].mxu0
    %v237 = vadd.f32 %v168, %v236
    %v238 = vpop.f32.mrb[0].mxu0
    %239 = vmatprep.mubr.f32.mxu0 0.0
    %240 = vmatmul.mubr.f32.gmra.mrb[0].mxu0 %v158
    %v241 = vpop.f32.mrb[0].mxu0
    %v242 = vadd.f32 %v168, %v241
    %v243 = vpop.f32.mrb[0].mxu0
    %244 = vdwg.mxu0
    %245 = vst.msk [vmem:[#allocation8] sm:$0xff] %vm75, %v237
    %246 = vst.msk [vmem:[#allocation8 + $0x8] sm:$0xff] %vm75, %v242
    // Predicated region
    $region34: #{feed_forward.1} parent=1 // pred_check
      _
    $region35: #{feed_forward.1} parent=1 // pred_check_branch
      %248 = sbr.rel (0) target = $region37
    $region36: #{feed_forward.1} parent=1 // pred_region
      %s250 = ssub.s32 256, 256
      %251 = vsyncadd [#allocation4], %s250
      %s252 = sshll.u32 [#allocation8], 4
      %s253 = int_to_ptr.vmem [resolvable:$true] %s252
      %258 = dma.vmem_to_hbm [thread:$0]  %s253, 256, %s5, [#allocation4], 128, 128, 8
    $region37: #{feed_forward.1} parent=1 // pred_fallthru
      _
    // Predicated region
    $region38: #{feed_forward.1} parent=1 // pred_check
      _
    $region39: #{feed_forward.1} parent=1 // pred_check_branch
      %260 = sbr.rel (0) target = $region41
    $region40: #{feed_forward.1} parent=1 // pred_region
      %261 = dma.done [#allocation4], 256
    $region41: #{feed_forward.1} parent=1 // pred_fallthru
      _
    %262 = vsyncpa [#allocation3], 1
    %263 = vsyncpa [#allocation6], 1
    %264 = vsyncpa [#allocation4], 1

</llo_original>
